<compile_context>
chip_gen: v7x
topology: tpu7x:2x2x1
jax: 0.10.0
libtpu: 0.0.40
codegen_flags: <defaults>
</compile_context>

<pallas_src>
import functools
import math

import jax
import jax.numpy as jnp
from jax import lax
from jax.experimental import pallas as pl
from jax.experimental.pallas import tpu as pltpu


def _round_up(x, m):
    return ((x + m - 1) // m) * m


def _cdiv(a, b):
    return -(-a // b)


def _pow_int_or_float(base, gamma):
    """(base)**gamma, lowering small integer gamma to repeated multiplies."""
    g = float(gamma)
    if g == int(g) and 0 <= int(g) <= 8:
        gi = int(g)
        if gi == 0:
            return jnp.ones_like(base)
        out = base
        for _ in range(gi - 1):
            out = out * base
        return out
    return base ** g


def _focal_elem(x, t, alpha, gamma, logits):
    """Per-element focal loss, f32 math."""
    if logits:
        # binary_cross_entropy_with_logits (numerically stable form)
        bce = jnp.maximum(x, 0.0) - x * t + jnp.log1p(jnp.exp(-jnp.abs(x)))
    else:
        # binary_cross_entropy: PyTorch clamps log at -100
        logp = jnp.maximum(jnp.log(x), -100.0)
        log1mp = jnp.maximum(jnp.log(1.0 - x), -100.0)
        bce = -(t * logp + (1.0 - t) * log1mp)
    pt = jnp.exp(-bce)
    return alpha * _pow_int_or_float(1.0 - pt, gamma) * bce


def _focal_sum_kernel(x_ref, t_ref, o_ref, acc_ref, *, alpha, gamma, logits,
                      n_valid, lane, block_rows, blocks_per_part):
    """Grid (P, K): partition p accumulates K blocks into a VMEM f32 block."""
    p = pl.program_id(0)
    k = pl.program_id(1)

    @pl.when(k == 0)
    def _():
        acc_ref[...] = jnp.zeros_like(acc_ref)

    f = _focal_elem(
        x_ref[...].astype(jnp.float32),
        t_ref[...].astype(jnp.float32),
        alpha, gamma, logits,
    )

    # Mask the ragged tail (and any OOB-padded block rows).  Static decision:
    # only emitted when n is not a multiple of the block element count.
    block_elems = block_rows * lane
    if n_valid % block_elems != 0:
        blk = p * blocks_per_part + k
        row = lax.broadcasted_iota(jnp.int32, (block_rows, lane), 0)
        col = lax.broadcasted_iota(jnp.int32, (block_rows, lane), 1)
        idx = (blk * block_rows + row) * lane + col
        f = jnp.where(idx < n_valid, f, 0.0)

    acc_ref[...] += f  # pure VPU tile adds, no cross-lane reduction per step

    @pl.when(k == pl.num_programs(1) - 1)
    def _():
        o_ref[...] = acc_ref[...]  # lane-dense partial-sum block for this partition


def _focal_map_kernel(x_ref, t_ref, o_ref, *, alpha, gamma, logits):
    """Per-element focal loss (no reduction)."""
    o_ref[...] = _focal_elem(
        x_ref[...].astype(jnp.float32),
        t_ref[...].astype(jnp.float32),
        alpha, gamma, logits,
    ).astype(o_ref.dtype)


def _layout(n, dtype):
    """Pick lane width, padded row count and block rows (~1 MiB f32 blocks)."""
    itemsize = jnp.dtype(dtype).itemsize
    sub = max(8, 32 // itemsize)            # 8 for f32, 16 for bf16, 32 for int8
    lane = 512 if n >= (1 << 21) else 128   # wide lanes only for big inputs
    rows = _cdiv(n, lane)
    rows_p = _round_up(rows, sub)           # minimal host padding granularity
    target_rows = 2048 if lane == 128 else 512
    block_rows = min(_round_up(target_rows, sub), rows_p)
    return lane, rows_p, block_rows


def _prep(a, pad_val, rows, lane, n):
    """Flatten to a lane-dense (rows, lane) slab; pad only if misaligned."""
    flat = a.reshape(-1)
    total = rows * lane
    if total != n:
        flat = jnp.pad(flat, (0, total - n), constant_values=pad_val)
    return flat.reshape(rows, lane)


def focal_loss(inputs, targets, *, alpha=1.0, gamma=2, logits=False, reduce=True):
    """JAX/Pallas equivalent of FocalLoss(alpha, gamma, logits, reduce)(inputs, targets)."""
    orig_shape = inputs.shape
    n = math.prod(orig_shape)
    if n == 0:  # guard against divide-by-zero; torch.mean of empty is NaN
        if reduce:
            return jnp.full((), jnp.nan, dtype=inputs.dtype)
        return jnp.zeros(orig_shape, inputs.dtype)

    lane, rows, block_rows = _layout(n, inputs.dtype)
    num_blocks = _cdiv(rows, block_rows)
    alpha = float(alpha)

    # Native-dtype streams; pad values only need to be log-safe (masked / sliced away).
    x2d = _prep(inputs, 0.0 if logits else 0.5, rows, lane, n)
    t2d = _prep(targets, 0.0, rows, lane, n)

    if reduce:
        # Split blocks over 2 partitions when possible so v7x uses both TCs.
        P = 2 if (num_blocks >= 4 and num_blocks % 2 == 0) else 1
        K = num_blocks // P

        in_blk = pl.BlockSpec((block_rows, lane), lambda p, k: (p * K + k, 0))

        partials = pl.pallas_call(
            functools.partial(
                _focal_sum_kernel, alpha=alpha, gamma=gamma, logits=logits,
                n_valid=n, lane=lane, block_rows=block_rows, blocks_per_part=K),
            out_shape=jax.ShapeDtypeStruct((P * block_rows, lane), jnp.float32),
            grid_spec=pltpu.PrefetchScalarGridSpec(
                num_scalar_prefetch=0,
                grid=(P, K),
                in_specs=[in_blk, in_blk],
                out_specs=pl.BlockSpec((block_rows, lane), lambda p, k: (p, 0)),
                scratch_shapes=[pltpu.VMEM((block_rows, lane), jnp.float32)],
            ),
            compiler_params=pltpu.CompilerParams(
                dimension_semantics=("parallel", "arbitrary")),
        )(x2d, t2d)
        total = jnp.sum(partials, dtype=jnp.float32)
        return (total / jnp.float32(n)).astype(inputs.dtype)
    else:
        blk = pl.BlockSpec((block_rows, lane), lambda i: (i, 0))
        out2d = pl.pallas_call(
            functools.partial(_focal_map_kernel, alpha=alpha, gamma=gamma,
                              logits=logits),
            out_shape=jax.ShapeDtypeStruct((rows, lane), inputs.dtype),
            grid_spec=pltpu.PrefetchScalarGridSpec(
                num_scalar_prefetch=0,
                grid=(num_blocks,),
                in_specs=[blk, blk],
                out_specs=blk,
            ),
            compiler_params=pltpu.CompilerParams(
                dimension_semantics=("parallel",)),
        )(x2d, t2d)
        return out2d.reshape(-1)[:n].reshape(orig_shape)


def _focal_loss_ref(inputs, targets, *, alpha=1.0, gamma=2, logits=False, reduce=True):
    f = _focal_elem(inputs.astype(jnp.float32), targets.astype(jnp.float32),
                    alpha, gamma, logits)
    return jnp.mean(f) if reduce else f.astype(inputs.dtype)


if __name__ == "__main__":
    key = jax.random.PRNGKey(0)
    k1, k2, k3, k4 = jax.random.split(key, 4)

    # inputs are probabilities (logits=False default), targets are {0,1}
    shape = (2, 4, 16, 16)
    x = jax.nn.sigmoid(jax.random.normal(k1, shape, jnp.float32))
    t = jax.random.bernoulli(k2, 0.5, shape).astype(jnp.float32)

    # default config: alpha=1, gamma=2, logits=False, reduce=True
    out = jax.block_until_ready(focal_loss(x, t))
    ref = _focal_loss_ref(x, t)
    assert jnp.allclose(out, ref, rtol=1e-5, atol=1e-6), (out, ref)

    # no-reduction (per-element) path
    out_map = jax.block_until_ready(focal_loss(x, t, reduce=False))
    ref_map = _focal_loss_ref(x, t, reduce=False)
    assert out_map.shape == shape
    assert jnp.allclose(out_map, ref_map, rtol=1e-5, atol=1e-6)

    # logits variant
    xl = jax.random.normal(k1, shape, jnp.float32)
    out_l = jax.block_until_ready(focal_loss(xl, t, logits=True))
    ref_l = _focal_loss_ref(xl, t, logits=True)
    assert jnp.allclose(out_l, ref_l, rtol=1e-5, atol=1e-6)

    # ragged size (numel not a multiple of 128) exercises the in-kernel tail mask
    rshape = (2, 3, 5, 7)
    xr = jax.nn.sigmoid(jax.random.normal(k3, rshape, jnp.float32))
    tr = jax.random.bernoulli(k4, 0.5, rshape).astype(jnp.float32)
    out_r = jax.block_until_ready(focal_loss(xr, tr))
    ref_r = _focal_loss_ref(xr, tr)
    assert jnp.allclose(out_r, ref_r, rtol=1e-5, atol=1e-6), (out_r, ref_r)

    # larger ragged case: multi-block grid + 2-partition parallel reduction
    bshape = (13, 17, 59, 61)
    xb = jax.nn.sigmoid(jax.random.normal(k3, bshape, jnp.float32))
    tb = jax.random.bernoulli(k4, 0.5, bshape).astype(jnp.float32)
    out_b = jax.block_until_ready(focal_loss(xb, tb))
    ref_b = _focal_loss_ref(xb, tb)
    assert jnp.allclose(out_b, ref_b, rtol=1e-4, atol=1e-6), (out_b, ref_b)

    print("KERNEL_OK")
</pallas_src>

<mosaic_0001>
module attributes {stable_mosaic.version = 11 : i64} {
  func.func @_focal_sum_kernel(%arg0: i32, %arg1: i32, %arg2: memref<16x128xf32, #tpu.memory_space<vmem>>, %arg3: memref<16x128xf32, #tpu.memory_space<vmem>>, %arg4: memref<16x128xf32, #tpu.memory_space<vmem>>, %arg5: memref<16x128xf32, #tpu.memory_space<vmem>>) attributes {dimension_semantics = [#tpu.dimension_semantics<parallel>, #tpu.dimension_semantics<arbitrary>], iteration_bounds = array<i64: 1, 1>, scalar_prefetch = 0 : i64, scratch_operands = 1 : i64, tpu.core_type = #tpu.core_type<tc>, window_params = [{transform_indices = @transform_0, window_bounds = array<i64: 16, 128>}, {transform_indices = @transform_1, window_bounds = array<i64: 16, 128>}, {transform_indices = @transform_2, window_bounds = array<i64: 16, 128>}]} {
    %c0_i32 = arith.constant 0 : i32
    %0 = arith.cmpi eq, %arg1, %c0_i32 : i32
    %1 = arith.extui %0 : i1 to i32
    %c0_i32_0 = arith.constant 0 : i32
    %2 = arith.cmpi ne, %1, %c0_i32_0 : i32
    scf.if %2 {
      %cst_17 = arith.constant 0.000000e+00 : f32
      %35 = vector.broadcast %cst_17 : f32 to vector<16x128xf32>
      %c0_18 = arith.constant 0 : index
      %c0_19 = arith.constant 0 : index
      %36 = vector.load %arg5[%c0_18, %c0_19] : memref<16x128xf32, #tpu.memory_space<vmem>>, vector<16x128xf32>
      tpu.vector_store %arg5[%c0_18, %c0_19], %35 {strides = array<i32>} : memref<16x128xf32, #tpu.memory_space<vmem>>, vector<16x128xf32>,
    } else {
    }
    %c0 = arith.constant 0 : index
    %c0_1 = arith.constant 0 : index
    %3 = vector.load %arg2[%c0, %c0_1] : memref<16x128xf32, #tpu.memory_space<vmem>>, vector<16x128xf32>
    %c0_2 = arith.constant 0 : index
    %c0_3 = arith.constant 0 : index
    %4 = vector.load %arg3[%c0_2, %c0_3] : memref<16x128xf32, #tpu.memory_space<vmem>>, vector<16x128xf32>
    %5 = math.log %3 : vector<16x128xf32>
    %cst = arith.constant -1.000000e+02 : f32
    %6 = vector.broadcast %cst : f32 to vector<16x128xf32>
    %7 = arith.maximumf %5, %6 : vector<16x128xf32>
    %cst_4 = arith.constant 1.000000e+00 : f32
    %8 = vector.broadcast %cst_4 : f32 to vector<16x128xf32>
    %9 = arith.subf %8, %3 : vector<16x128xf32>
    %10 = math.log %9 : vector<16x128xf32>
    %cst_5 = arith.constant -1.000000e+02 : f32
    %11 = vector.broadcast %cst_5 : f32 to vector<16x128xf32>
    %12 = arith.maximumf %10, %11 : vector<16x128xf32>
    %13 = arith.mulf %4, %7 : vector<16x128xf32>
    %cst_6 = arith.constant 1.000000e+00 : f32
    %14 = vector.broadcast %cst_6 : f32 to vector<16x128xf32>
    %15 = arith.subf %14, %4 : vector<16x128xf32>
    %16 = arith.mulf %15, %12 : vector<16x128xf32>
    %17 = arith.addf %13, %16 : vector<16x128xf32>
    %cst_7 = arith.constant 0.000000e+00 : f32
    %18 = vector.broadcast %cst_7 : f32 to vector<16x128xf32>
    %19 = arith.subf %18, %17 : vector<16x128xf32>
    %cst_8 = arith.constant 0.000000e+00 : f32
    %20 = vector.broadcast %cst_8 : f32 to vector<16x128xf32>
    %21 = arith.subf %20, %19 : vector<16x128xf32>
    %22 = math.exp %21 : vector<16x128xf32>
    %cst_9 = arith.constant 1.000000e+00 : f32
    %23 = vector.broadcast %cst_9 : f32 to vector<16x128xf32>
    %24 = arith.subf %23, %22 : vector<16x128xf32>
    %25 = arith.mulf %24, %24 : vector<16x128xf32>
    %cst_10 = arith.constant 1.000000e+00 : f32
    %26 = vector.broadcast %cst_10 : f32 to vector<16x128xf32>
    %27 = arith.mulf %26, %25 : vector<16x128xf32>
    %28 = arith.mulf %27, %19 : vector<16x128xf32>
    %c0_11 = arith.constant 0 : index
    %c0_12 = arith.constant 0 : index
    %29 = vector.load %arg5[%c0_11, %c0_12] : memref<16x128xf32, #tpu.memory_space<vmem>>, vector<16x128xf32>
    %30 = arith.addf %29, %28 : vector<16x128xf32>
    %c0_13 = arith.constant 0 : index
    %c0_14 = arith.constant 0 : index
    %31 = vector.load %arg5[%c0_13, %c0_14] : memref<16x128xf32, #tpu.memory_space<vmem>>, vector<16x128xf32>
    tpu.vector_store %arg5[%c0_13, %c0_14], %30 {strides = array<i32>} : memref<16x128xf32, #tpu.memory_space<vmem>>, vector<16x128xf32>,
    %c0_i32_15 = arith.constant 0 : i32
    %32 = arith.cmpi eq, %arg1, %c0_i32_15 : i32
    %33 = arith.extui %32 : i1 to i32
    %c0_i32_16 = arith.constant 0 : i32
    %34 = arith.cmpi ne, %33, %c0_i32_16 : i32
    scf.if %34 {
      %c0_17 = arith.constant 0 : index
      %c0_18 = arith.constant 0 : index
      %35 = vector.load %arg5[%c0_17, %c0_18] : memref<16x128xf32, #tpu.memory_space<vmem>>, vector<16x128xf32>
      %c0_19 = arith.constant 0 : index
      %c0_20 = arith.constant 0 : index
      %36 = vector.load %arg4[%c0_19, %c0_20] : memref<16x128xf32, #tpu.memory_space<vmem>>, vector<16x128xf32>
      tpu.vector_store %arg4[%c0_19, %c0_20], %35 {strides = array<i32>} : memref<16x128xf32, #tpu.memory_space<vmem>>, vector<16x128xf32>,
    } else {
    }
    return
  }
  func.func @transform_0(%arg0: i32, %arg1: i32) -> (i32, i32) {
    %c1_i32 = arith.constant 1 : i32
    %0 = arith.muli %arg0, %c1_i32 : i32
    %1 = arith.addi %0, %arg1 : i32
    %c0_i32 = arith.constant 0 : i32
    %c0_i32_0 = arith.constant 0 : i32
    return %1, %c0_i32 : i32, i32
  }
  func.func @transform_1(%arg0: i32, %arg1: i32) -> (i32, i32) {
    %c1_i32 = arith.constant 1 : i32
    %0 = arith.muli %arg0, %c1_i32 : i32
    %1 = arith.addi %0, %arg1 : i32
    %c0_i32 = arith.constant 0 : i32
    %c0_i32_0 = arith.constant 0 : i32
    return %1, %c0_i32 : i32, i32
  }
  func.func @transform_2(%arg0: i32, %arg1: i32) -> (i32, i32) {
    %c0_i32 = arith.constant 0 : i32
    %c0_i32_0 = arith.constant 0 : i32
    return %arg0, %c0_i32 : i32, i32
  }
}

</mosaic_0001>

<llo_original>
// kernel: tpu_custom_call.1
$region0: #{tpu_custom_call.1}
  #allocation0 [shape = 'u32[]', space=smem, size = 0x4, offset = 0x4, fixed_abs, tag = 'smem constant byte address 0x4 - core index']
  #allocation1 [shape = 'u32[144,128]{1,0:T(1,128)}', space=vmem, size = 0x12000, scoped, tag = 'internal scratch']
  #allocation2 [shape = 'f32[16,128]{1,0:T(8,128)}', space=vmem, size = 0x2000, scoped, tag = 'scratch operand']
  %s0 = inlined_call_operand.hbm [shape: f32[16,128], index: 0, kind: input, shape index: {}]
  %s1 = inlined_call_operand.hbm [shape: f32[16,128], index: 1, kind: input, shape index: {}]
  %s2 = inlined_call_operand.hbm [shape: f32[16,128], index: 2, kind: output, shape index: {}]
  %s3 = sld [smem:[#allocation0]]
  $region34: #{tpu_custom_call.1} parent=0
    _
  %s5 = ssub.s32 1, %s3
  %s6 = scalar_select 0, %s5, %s3
  $region1: #{tpu_custom_call.1} parent=0
    #allocation3 [shape = 'u8[8192]{0}', space=vmem, size = 0x2000, scoped, tag = 'input window, operand 0, single buffered']
    #allocation4 [shape = 's32[1]{0}', space=sflag, size = 0x4, scoped, tag = 'scoped memory for tpu_custom_call.1']
    #allocation5 [shape = 's32[1]{0}', space=sflag, size = 0x4, scoped, tag = 'scoped memory for tpu_custom_call.1']
    #allocation6 [shape = 'u8[8192]{0}', space=vmem, size = 0x2000, scoped, tag = 'input window, operand 1, single buffered']
    #allocation7 [shape = 's32[1]{0}', space=sflag, size = 0x4, scoped, tag = 'scoped memory for tpu_custom_call.1']
    #allocation8 [shape = 'u8[8192]{0}', space=vmem, size = 0x2000, scoped, tag = 'output window, operand 0, single buffered']
    %7 = vsyncpa [#allocation4], 0
    %8 = vsyncpa [#allocation7], 0
    %9 = vsyncpa [#allocation5], 0
    // Predicated region
    $region2: #{tpu_custom_call.1} parent=1 // pred_check
      _
    $region3: #{tpu_custom_call.1} parent=1 // pred_check_branch
      %11 = sbr.rel (0) target = $region5
    $region4: #{tpu_custom_call.1} parent=1 // pred_region
      %s12 = sadd.s32 0, 0
      %s13 = smul.u32 2, %s12
      %s15 = ssub.s32 256, 256
      %16 = vsyncadd [#allocation4], %s15
      %s17 = smul.addr %s13, 128
      %s18 = scalar_lea.hbm %s0, %s17
      %s19 = sshll.u32 [#allocation3], 4
      %s20 = int_to_ptr.vmem [resolvable:$true] %s19
      %25 = dma.hbm_to_vmem [thread:$0]  %s18, 256, %s20, [#allocation4], 128, 128, 8
    $region5: #{tpu_custom_call.1} parent=1 // pred_fallthru
      _
    // Predicated region
    $region6: #{tpu_custom_call.1} parent=1 // pred_check
      _
    $region7: #{tpu_custom_call.1} parent=1 // pred_check_branch
      %27 = sbr.rel (0) target = $region9
    $region8: #{tpu_custom_call.1} parent=1 // pred_region
      %s28 = sadd.s32 0, 0
      %s29 = smul.u32 2, %s28
      %s31 = ssub.s32 256, 256
      %32 = vsyncadd [#allocation7], %s31
      %s33 = smul.addr %s29, 128
      %s34 = scalar_lea.hbm %s1, %s33
      %s35 = sshll.u32 [#allocation6], 4
      %s36 = int_to_ptr.vmem [resolvable:$true] %s35
      %41 = dma.hbm_to_vmem [thread:$0]  %s34, 256, %s36, [#allocation7], 128, 128, 8
    $region9: #{tpu_custom_call.1} parent=1 // pred_fallthru
      _
    // Predicated region
    $region10: #{tpu_custom_call.1} parent=1 // pred_check
      _
    $region11: #{tpu_custom_call.1} parent=1 // pred_check_branch
      %43 = sbr.rel (0) target = $region13
    $region12: #{tpu_custom_call.1} parent=1 // pred_region
      %44 = dma.done [#allocation4], 256
    $region13: #{tpu_custom_call.1} parent=1 // pred_fallthru
      _
    // Predicated region
    $region14: #{tpu_custom_call.1} parent=1 // pred_check
      _
    $region15: #{tpu_custom_call.1} parent=1 // pred_check_branch
      %46 = sbr.rel (0) target = $region17
    $region16: #{tpu_custom_call.1} parent=1 // pred_region
      %47 = dma.done [#allocation7], 256
    $region17: #{tpu_custom_call.1} parent=1 // pred_fallthru
      _
    %s48 = sadd.s32 0, 0
    %s49 = smul.u32 2, %s48
    %s50 = sadd.s32 0, 0
    %s51 = smul.u32 2, %s50
    %p52 = scmp.eq.s32.totalorder 0, 0
    // Predicated region
    $region18: #{tpu_custom_call.1} parent=1 // pred_check
      %p53 = pneg %p52
    $region19: #{tpu_custom_call.1} parent=1 // pred_check_branch
      %55 = sbr.rel (%p53) target = $region21
    $region20: #{tpu_custom_call.1} parent=1 // pred_region
      %56 = vst [vmem:[#allocation2] sm:$0xff] 0.0
      %57 = vst [vmem:[#allocation2 + $0x8] sm:$0xff] 0.0
    $region21: #{tpu_custom_call.1} parent=1 // pred_fallthru
      _
    %v58 = vld [vmem:[#allocation3] sm:$0xff]
    %v59 = vld [vmem:[#allocation3 + $0x8] sm:$0xff]
    %v60 = vld [vmem:[#allocation6] sm:$0xff]
    %v61 = vld [vmem:[#allocation6 + $0x8] sm:$0xff]
    %v62 = vlog2.pop %v58
    %v63 = vmul.f32 %v62, 0.6931472
    %v64 = vlog2.pop %v59
    %v65 = vmul.f32 %v64, 0.6931472
    %v66 = vmax.f32 %v63, -100.0
    %v67 = vmax.f32 %v65, -100.0
    %v68 = vsub.f32 1.0, %v58
    %v69 = vsub.f32 1.0, %v59
    %v70 = vlog2.pop %v68
    %v71 = vmul.f32 %v70, 0.6931472
    %v72 = vlog2.pop %v69
    %v73 = vmul.f32 %v72, 0.6931472
    %v74 = vmax.f32 %v71, -100.0
    %v75 = vmax.f32 %v73, -100.0
    %v76 = vmul.f32 %v60, %v66
    %v77 = vmul.f32 %v61, %v67
    %v78 = vsub.f32 1.0, %v60
    %v79 = vsub.f32 1.0, %v61
    %v80 = vmul.f32 %v78, %v74
    %v81 = vmul.f32 %v79, %v75
    %v82 = vadd.f32 %v76, %v80
    %v83 = vadd.f32 %v77, %v81
    %v84 = vsub.f32 0.0, %v82
    %v85 = vsub.f32 0.0, %v83
    %v86 = vsub.f32 0.0, %v84
    %v87 = vsub.f32 0.0, %v85
    %v88 = vmul.f32 %v86, 1.442695
    %v89 = vpow.pop %v88
    %v90 = vmul.f32 %v87, 1.442695
    %v91 = vpow.pop %v90
    %v92 = vsub.f32 1.0, %v89
    %v93 = vsub.f32 1.0, %v91
    %v94 = vmul.f32 %v92, %v92
    %v95 = vmul.f32 %v93, %v93
    %v96 = vmul.f32 %v94, %v84
    %v97 = vmul.f32 %v95, %v85
    %v98 = vld [vmem:[#allocation2] sm:$0xff]
    %v99 = vld [vmem:[#allocation2 + $0x8] sm:$0xff]
    %v100 = vadd.f32 %v98, %v96
    %v101 = vadd.f32 %v99, %v97
    %102 = vst [vmem:[#allocation2] sm:$0xff] %v100
    %103 = vst [vmem:[#allocation2 + $0x8] sm:$0xff] %v101
    // Predicated region
    $region22: #{tpu_custom_call.1} parent=1 // pred_check
      %p104 = pneg %p52
    $region23: #{tpu_custom_call.1} parent=1 // pred_check_branch
      %106 = sbr.rel (%p104) target = $region25
    $region24: #{tpu_custom_call.1} parent=1 // pred_region
      %v107 = vld [vmem:[#allocation2] sm:$0xff]
      %v108 = vld [vmem:[#allocation2 + $0x8] sm:$0xff]
      %109 = vst [vmem:[#allocation8] sm:$0xff] %v107
      %110 = vst [vmem:[#allocation8 + $0x8] sm:$0xff] %v108
    $region25: #{tpu_custom_call.1} parent=1 // pred_fallthru
      _
    // Predicated region
    $region26: #{tpu_custom_call.1} parent=1 // pred_check
      _
    $region27: #{tpu_custom_call.1} parent=1 // pred_check_branch
      %112 = sbr.rel (0) target = $region29
    $region28: #{tpu_custom_call.1} parent=1 // pred_region
      %s114 = ssub.s32 256, 256
      %115 = vsyncadd [#allocation5], %s114
      %s116 = sshll.u32 [#allocation8], 4
      %s117 = int_to_ptr.vmem [resolvable:$true] %s116
      %122 = dma.vmem_to_hbm [thread:$0]  %s117, 256, %s2, [#allocation5], 128, 128, 8
    $region29: #{tpu_custom_call.1} parent=1 // pred_fallthru
      _
    // Predicated region
    $region30: #{tpu_custom_call.1} parent=1 // pred_check
      _
    $region31: #{tpu_custom_call.1} parent=1 // pred_check_branch
      %124 = sbr.rel (0) target = $region33
    $region32: #{tpu_custom_call.1} parent=1 // pred_region
      %125 = dma.done [#allocation5], 256
    $region33: #{tpu_custom_call.1} parent=1 // pred_fallthru
      _
    %126 = vsyncpa [#allocation4], 1
    %127 = vsyncpa [#allocation7], 1
    %128 = vsyncpa [#allocation5], 1

</llo_original>
